<compile_context>
chip_gen: v5e
topology: v5e:2x2
jax: 0.10.0
libtpu: 0.0.40
codegen_flags: <defaults>
</compile_context>

<pallas_src>
import functools
import math

import jax
import jax.numpy as jnp
from jax import lax
from jax.experimental import pallas as pl
from jax.experimental.pallas import tpu as pltpu


def _round_up(x, m):
    return (x + m - 1) // m * m


def _conv_shifted_matmul_kernel(w_ref, b_ref, x_ref, o_ref, *,
                                offsets, t_l, tiled):
    # w_ref: (KH*KW, OC, C)   EqualLR-scaled weight, resident in VMEM
    # b_ref: (OC, 1)          bias (f32)
    # x_ref: (C, P_in_pad)    padded + lane-flattened input, one batch element
    # o_ref: (OC, T_L)        lane-dense output tile
    if tiled:
        base = pl.multiple_of(pl.program_id(1) * t_l, 128)
    else:
        base = 0  # single tile -> fully static slices

    oc = o_ref.shape[0]
    # Fold bias into the accumulator init (one broadcast, outside the loop).
    acc = jnp.broadcast_to(b_ref[...], (oc, t_l)).astype(jnp.float32)
    for idx, off in enumerate(offsets):            # static KH*KW-step unroll
        xs = x_ref[:, pl.ds(base + off, t_l)]      # (C, T_L) shifted window
        acc = acc + jnp.dot(w_ref[idx], xs,
                            preferred_element_type=jnp.float32)
    o_ref[...] = acc.astype(o_ref.dtype)


def equal_conv2d(x, weight, bias, padding):
    """EqualConv2d forward.

    x:      (N, C, H, W)      NCHW, matches PyTorch
    weight: (OC, C, KH, KW)   raw (un-scaled) conv weight, i.e. weight_orig
    bias:   (OC,)
    """
    N, C, H, W = x.shape
    OC, _, KH, KW = weight.shape

    # EqualLR scaling: weight * sqrt(2 / fan_in), fan_in = C * KH * KW
    fan_in = C * KH * KW
    w_scaled = weight * jnp.asarray(math.sqrt(2.0 / fan_in), weight.dtype)

    Hpad, Wpad = H + 2 * padding, W + 2 * padding
    Ho, Wo = Hpad - KH + 1, Wpad - KW + 1

    # ---- lane geometry (everything a multiple of 128 on the lane axis) ----
    L_raw = Ho * Wpad                       # flat output span we keep
    if L_raw <= 4096:
        T_L = _round_up(L_raw, 128)         # single lane-dense tile
    else:
        T_L = 4096                          # multiple of 128, VMEM-friendly
    L_pad = _round_up(L_raw, T_L)
    num_t = L_pad // T_L
    off_max = (KH - 1) * Wpad + (KW - 1)
    P_in = Hpad * Wpad
    P_in_pad = _round_up(max(P_in, off_max + L_pad), 128)

    # ---- wrapper-side prep: pad spatially, flatten, lane-pad with zeros ----
    x_sp = jnp.pad(x, ((0, 0), (0, 0), (padding, padding), (padding, padding)))
    x_flat = x_sp.reshape(N, C, P_in)
    x_flat = jnp.pad(x_flat, ((0, 0), (0, 0), (0, P_in_pad - P_in)))

    # (OC, C, KH, KW) -> (KH*KW, OC, C), flat index = kh*KW + kw
    w_mat = jnp.transpose(w_scaled, (2, 3, 0, 1)).reshape(KH * KW, OC, C)
    b_mat = bias.reshape(OC, 1).astype(jnp.float32)

    offsets = tuple(kh * Wpad + kw for kh in range(KH) for kw in range(KW))

    kernel = functools.partial(_conv_shifted_matmul_kernel,
                               offsets=offsets, t_l=T_L, tiled=(num_t > 1))

    itemsize = jnp.dtype(x.dtype).itemsize
    flops = 2 * N * OC * C * KH * KW * Ho * Wo
    bytes_accessed = (N * C * P_in_pad * itemsize          # input
                      + KH * KW * OC * C * itemsize        # weight
                      + N * OC * L_pad * itemsize)         # output

    out_flat = pl.pallas_call(
        kernel,
        out_shape=jax.ShapeDtypeStruct((N, OC, L_pad), x.dtype),
        grid_spec=pltpu.PrefetchScalarGridSpec(
            num_scalar_prefetch=0,
            grid=(N, num_t),
            in_specs=[
                # weight + bias: resident (constant index map -> one DMA)
                pl.BlockSpec((KH * KW, OC, C), lambda n, t: (0, 0, 0)),
                pl.BlockSpec((OC, 1), lambda n, t: (0, 0)),
                # per-batch padded input, constant along the tile axis
                pl.BlockSpec((pl.Squeezed(), C, P_in_pad),
                             lambda n, t: (n, 0, 0)),
            ],
            out_specs=pl.BlockSpec((pl.Squeezed(), OC, T_L),
                                   lambda n, t: (n, 0, t)),
        ),
        compiler_params=pltpu.CompilerParams(
            dimension_semantics=("parallel", "parallel")),
        cost_estimate=pl.CostEstimate(flops=flops, transcendentals=0,
                                      bytes_accessed=bytes_accessed),
    )(w_mat, b_mat, x_flat)

    # Strip lane padding and the padded-width garbage columns (wo >= Wo).
    out = out_flat[:, :, :L_raw].reshape(N, OC, Ho, Wpad)[:, :, :, :Wo]
    return out


if __name__ == "__main__":
    # EqualConv2d(in_channel=4, out_channel=8, kernel_size=3, padding=1)
    key = jax.random.PRNGKey(0)
    k_x, k_w = jax.random.split(key)

    N, C, H, W = 2, 4, 16, 16
    OC, KH, KW = 8, 3, 3
    padding = 1

    x = jax.random.normal(k_x, (N, C, H, W), dtype=jnp.float32)
    # conv.weight.data.normal_() ; conv.bias.data.zero_()
    weight = jax.random.normal(k_w, (OC, C, KH, KW), dtype=jnp.float32)
    bias = jnp.zeros((OC,), dtype=jnp.float32)

    out = equal_conv2d(x, weight, bias, padding)
    out = jax.block_until_ready(out)

    # Reference check against lax conv with the same EqualLR scaling.
    w_scaled = weight * jnp.float32(math.sqrt(2.0 / (C * KH * KW)))
    ref = lax.conv_general_dilated(
        x, w_scaled, window_strides=(1, 1),
        padding=[(padding, padding), (padding, padding)],
        dimension_numbers=("NCHW", "OIHW", "NCHW"),
    ) + bias.reshape(1, OC, 1, 1)
    assert out.shape == (N, OC, H, W)
    assert jnp.allclose(out, ref, atol=1e-4, rtol=1e-4), "mismatch vs lax conv"

    print("KERNEL_OK")
</pallas_src>

<mosaic_0001>
module attributes {stable_mosaic.version = 11 : i64} {
  func.func @_conv_shifted_matmul_kernel(%arg0: i32, %arg1: i32, %arg2: memref<9x8x4xf32, #tpu.memory_space<vmem>>, %arg3: memref<8x1xf32, #tpu.memory_space<vmem>>, %arg4: memref<1x4x512xf32, #tpu.memory_space<vmem>>, %arg5: memref<1x8x384xf32, #tpu.memory_space<vmem>>) attributes {dimension_semantics = [#tpu.dimension_semantics<parallel>, #tpu.dimension_semantics<parallel>], iteration_bounds = array<i64: 2, 1>, scalar_prefetch = 0 : i64, scratch_operands = 0 : i64, tpu.core_type = #tpu.core_type<tc>, window_params = [{pipeline_mode = #tpu.pipeline_mode<synchronous>, transform_indices = @transform_0, window_bounds = array<i64: 9, 8, 4>}, {pipeline_mode = #tpu.pipeline_mode<synchronous>, transform_indices = @transform_1, window_bounds = array<i64: 8, 1>}, {transform_indices = @transform_2, window_bounds = array<i64: 1, 4, 512>}, {transform_indices = @transform_3, window_bounds = array<i64: 1, 8, 384>}]} {
    %c0 = arith.constant 0 : index
    %c0_0 = arith.constant 0 : index
    %0 = vector.load %arg3[%c0, %c0_0] : memref<8x1xf32, #tpu.memory_space<vmem>>, vector<8x1xf32>
    %1 = vector.shape_cast %0 : vector<8x1xf32> to vector<8x1xf32>
    %2 = vector.broadcast %1 : vector<8x1xf32> to vector<8x384xf32>
    %c0_1 = arith.constant 0 : index
    %c0_2 = arith.constant 0 : index
    %c0_3 = arith.constant 0 : index
    %3 = vector.load %arg4[%c0_1, %c0_2, %c0_3] : memref<1x4x512xf32, #tpu.memory_space<vmem>>, vector<1x4x384xf32>
    %4 = vector.shape_cast %3 : vector<1x4x384xf32> to vector<4x384xf32>
    %c0_4 = arith.constant 0 : index
    %c0_5 = arith.constant 0 : index
    %c0_6 = arith.constant 0 : index
    %5 = vector.load %arg2[%c0_4, %c0_5, %c0_6] : memref<9x8x4xf32, #tpu.memory_space<vmem>>, vector<1x8x4xf32>
    %6 = vector.shape_cast %5 : vector<1x8x4xf32> to vector<8x4xf32>
    %cst = arith.constant dense<0.000000e+00> : vector<8x384xf32>
    %7 = tpu.matmul %6, %4, %cst {dimension_numbers = #tpu.dot_dimension_numbers<[1], [0], [0], [1], [0, 0, 1, 1], [], []>} : vector<8x4xf32>, vector<4x384xf32>, vector<8x384xf32> -> vector<8x384xf32>
    %8 = arith.addf %2, %7 : vector<8x384xf32>
    %c0_7 = arith.constant 0 : index
    %c0_8 = arith.constant 0 : index
    %c1 = arith.constant 1 : index
    %9 = vector.load %arg4[%c0_7, %c0_8, %c1] : memref<1x4x512xf32, #tpu.memory_space<vmem>>, vector<1x4x384xf32>
    %10 = vector.shape_cast %9 : vector<1x4x384xf32> to vector<4x384xf32>
    %c1_9 = arith.constant 1 : index
    %c0_10 = arith.constant 0 : index
    %c0_11 = arith.constant 0 : index
    %11 = vector.load %arg2[%c1_9, %c0_10, %c0_11] : memref<9x8x4xf32, #tpu.memory_space<vmem>>, vector<1x8x4xf32>
    %12 = vector.shape_cast %11 : vector<1x8x4xf32> to vector<8x4xf32>
    %cst_12 = arith.constant dense<0.000000e+00> : vector<8x384xf32>
    %13 = tpu.matmul %12, %10, %cst_12 {dimension_numbers = #tpu.dot_dimension_numbers<[1], [0], [0], [1], [0, 0, 1, 1], [], []>} : vector<8x4xf32>, vector<4x384xf32>, vector<8x384xf32> -> vector<8x384xf32>
    %14 = arith.addf %8, %13 : vector<8x384xf32>
    %c0_13 = arith.constant 0 : index
    %c0_14 = arith.constant 0 : index
    %c2 = arith.constant 2 : index
    %15 = vector.load %arg4[%c0_13, %c0_14, %c2] : memref<1x4x512xf32, #tpu.memory_space<vmem>>, vector<1x4x384xf32>
    %16 = vector.shape_cast %15 : vector<1x4x384xf32> to vector<4x384xf32>
    %c2_15 = arith.constant 2 : index
    %c0_16 = arith.constant 0 : index
    %c0_17 = arith.constant 0 : index
    %17 = vector.load %arg2[%c2_15, %c0_16, %c0_17] : memref<9x8x4xf32, #tpu.memory_space<vmem>>, vector<1x8x4xf32>
    %18 = vector.shape_cast %17 : vector<1x8x4xf32> to vector<8x4xf32>
    %cst_18 = arith.constant dense<0.000000e+00> : vector<8x384xf32>
    %19 = tpu.matmul %18, %16, %cst_18 {dimension_numbers = #tpu.dot_dimension_numbers<[1], [0], [0], [1], [0, 0, 1, 1], [], []>} : vector<8x4xf32>, vector<4x384xf32>, vector<8x384xf32> -> vector<8x384xf32>
    %20 = arith.addf %14, %19 : vector<8x384xf32>
    %c0_19 = arith.constant 0 : index
    %c0_20 = arith.constant 0 : index
    %c18 = arith.constant 18 : index
    %21 = vector.load %arg4[%c0_19, %c0_20, %c18] : memref<1x4x512xf32, #tpu.memory_space<vmem>>, vector<1x4x384xf32>
    %22 = vector.shape_cast %21 : vector<1x4x384xf32> to vector<4x384xf32>
    %c3 = arith.constant 3 : index
    %c0_21 = arith.constant 0 : index
    %c0_22 = arith.constant 0 : index
    %23 = vector.load %arg2[%c3, %c0_21, %c0_22] : memref<9x8x4xf32, #tpu.memory_space<vmem>>, vector<1x8x4xf32>
    %24 = vector.shape_cast %23 : vector<1x8x4xf32> to vector<8x4xf32>
    %cst_23 = arith.constant dense<0.000000e+00> : vector<8x384xf32>
    %25 = tpu.matmul %24, %22, %cst_23 {dimension_numbers = #tpu.dot_dimension_numbers<[1], [0], [0], [1], [0, 0, 1, 1], [], []>} : vector<8x4xf32>, vector<4x384xf32>, vector<8x384xf32> -> vector<8x384xf32>
    %26 = arith.addf %20, %25 : vector<8x384xf32>
    %c0_24 = arith.constant 0 : index
    %c0_25 = arith.constant 0 : index
    %c19 = arith.constant 19 : index
    %27 = vector.load %arg4[%c0_24, %c0_25, %c19] : memref<1x4x512xf32, #tpu.memory_space<vmem>>, vector<1x4x384xf32>
    %28 = vector.shape_cast %27 : vector<1x4x384xf32> to vector<4x384xf32>
    %c4 = arith.constant 4 : index
    %c0_26 = arith.constant 0 : index
    %c0_27 = arith.constant 0 : index
    %29 = vector.load %arg2[%c4, %c0_26, %c0_27] : memref<9x8x4xf32, #tpu.memory_space<vmem>>, vector<1x8x4xf32>
    %30 = vector.shape_cast %29 : vector<1x8x4xf32> to vector<8x4xf32>
    %cst_28 = arith.constant dense<0.000000e+00> : vector<8x384xf32>
    %31 = tpu.matmul %30, %28, %cst_28 {dimension_numbers = #tpu.dot_dimension_numbers<[1], [0], [0], [1], [0, 0, 1, 1], [], []>} : vector<8x4xf32>, vector<4x384xf32>, vector<8x384xf32> -> vector<8x384xf32>
    %32 = arith.addf %26, %31 : vector<8x384xf32>
    %c0_29 = arith.constant 0 : index
    %c0_30 = arith.constant 0 : index
    %c20 = arith.constant 20 : index
    %33 = vector.load %arg4[%c0_29, %c0_30, %c20] : memref<1x4x512xf32, #tpu.memory_space<vmem>>, vector<1x4x384xf32>
    %34 = vector.shape_cast %33 : vector<1x4x384xf32> to vector<4x384xf32>
    %c5 = arith.constant 5 : index
    %c0_31 = arith.constant 0 : index
    %c0_32 = arith.constant 0 : index
    %35 = vector.load %arg2[%c5, %c0_31, %c0_32] : memref<9x8x4xf32, #tpu.memory_space<vmem>>, vector<1x8x4xf32>
    %36 = vector.shape_cast %35 : vector<1x8x4xf32> to vector<8x4xf32>
    %cst_33 = arith.constant dense<0.000000e+00> : vector<8x384xf32>
    %37 = tpu.matmul %36, %34, %cst_33 {dimension_numbers = #tpu.dot_dimension_numbers<[1], [0], [0], [1], [0, 0, 1, 1], [], []>} : vector<8x4xf32>, vector<4x384xf32>, vector<8x384xf32> -> vector<8x384xf32>
    %38 = arith.addf %32, %37 : vector<8x384xf32>
    %c0_34 = arith.constant 0 : index
    %c0_35 = arith.constant 0 : index
    %c36 = arith.constant 36 : index
    %39 = vector.load %arg4[%c0_34, %c0_35, %c36] : memref<1x4x512xf32, #tpu.memory_space<vmem>>, vector<1x4x384xf32>
    %40 = vector.shape_cast %39 : vector<1x4x384xf32> to vector<4x384xf32>
    %c6 = arith.constant 6 : index
    %c0_36 = arith.constant 0 : index
    %c0_37 = arith.constant 0 : index
    %41 = vector.load %arg2[%c6, %c0_36, %c0_37] : memref<9x8x4xf32, #tpu.memory_space<vmem>>, vector<1x8x4xf32>
    %42 = vector.shape_cast %41 : vector<1x8x4xf32> to vector<8x4xf32>
    %cst_38 = arith.constant dense<0.000000e+00> : vector<8x384xf32>
    %43 = tpu.matmul %42, %40, %cst_38 {dimension_numbers = #tpu.dot_dimension_numbers<[1], [0], [0], [1], [0, 0, 1, 1], [], []>} : vector<8x4xf32>, vector<4x384xf32>, vector<8x384xf32> -> vector<8x384xf32>
    %44 = arith.addf %38, %43 : vector<8x384xf32>
    %c0_39 = arith.constant 0 : index
    %c0_40 = arith.constant 0 : index
    %c37 = arith.constant 37 : index
    %45 = vector.load %arg4[%c0_39, %c0_40, %c37] : memref<1x4x512xf32, #tpu.memory_space<vmem>>, vector<1x4x384xf32>
    %46 = vector.shape_cast %45 : vector<1x4x384xf32> to vector<4x384xf32>
    %c7 = arith.constant 7 : index
    %c0_41 = arith.constant 0 : index
    %c0_42 = arith.constant 0 : index
    %47 = vector.load %arg2[%c7, %c0_41, %c0_42] : memref<9x8x4xf32, #tpu.memory_space<vmem>>, vector<1x8x4xf32>
    %48 = vector.shape_cast %47 : vector<1x8x4xf32> to vector<8x4xf32>
    %cst_43 = arith.constant dense<0.000000e+00> : vector<8x384xf32>
    %49 = tpu.matmul %48, %46, %cst_43 {dimension_numbers = #tpu.dot_dimension_numbers<[1], [0], [0], [1], [0, 0, 1, 1], [], []>} : vector<8x4xf32>, vector<4x384xf32>, vector<8x384xf32> -> vector<8x384xf32>
    %50 = arith.addf %44, %49 : vector<8x384xf32>
    %c0_44 = arith.constant 0 : index
    %c0_45 = arith.constant 0 : index
    %c38 = arith.constant 38 : index
    %51 = vector.load %arg4[%c0_44, %c0_45, %c38] : memref<1x4x512xf32, #tpu.memory_space<vmem>>, vector<1x4x384xf32>
    %52 = vector.shape_cast %51 : vector<1x4x384xf32> to vector<4x384xf32>
    %c8 = arith.constant 8 : index
    %c0_46 = arith.constant 0 : index
    %c0_47 = arith.constant 0 : index
    %53 = vector.load %arg2[%c8, %c0_46, %c0_47] : memref<9x8x4xf32, #tpu.memory_space<vmem>>, vector<1x8x4xf32>
    %54 = vector.shape_cast %53 : vector<1x8x4xf32> to vector<8x4xf32>
    %cst_48 = arith.constant dense<0.000000e+00> : vector<8x384xf32>
    %55 = tpu.matmul %54, %52, %cst_48 {dimension_numbers = #tpu.dot_dimension_numbers<[1], [0], [0], [1], [0, 0, 1, 1], [], []>} : vector<8x4xf32>, vector<4x384xf32>, vector<8x384xf32> -> vector<8x384xf32>
    %56 = arith.addf %50, %55 : vector<8x384xf32>
    %c0_49 = arith.constant 0 : index
    %c0_50 = arith.constant 0 : index
    %c0_51 = arith.constant 0 : index
    %57 = vector.load %arg5[%c0_49, %c0_50, %c0_51] : memref<1x8x384xf32, #tpu.memory_space<vmem>>, vector<1x8x384xf32>
    %58 = vector.shape_cast %57 : vector<1x8x384xf32> to vector<8x384xf32>
    %59 = vector.shape_cast %56 : vector<8x384xf32> to vector<1x8x384xf32>
    tpu.vector_store %arg5[%c0_49, %c0_50, %c0_51], %59 {strides = array<i32>} : memref<1x8x384xf32, #tpu.memory_space<vmem>>, vector<1x8x384xf32>,
    return
  }
  func.func @transform_0(%arg0: i32, %arg1: i32) -> (i32, i32, i32) {
    %c0_i32 = arith.constant 0 : i32
    %c0_i32_0 = arith.constant 0 : i32
    %c0_i32_1 = arith.constant 0 : i32
    %c0_i32_2 = arith.constant 0 : i32
    return %c0_i32, %c0_i32_0, %c0_i32_1 : i32, i32, i32
  }
  func.func @transform_1(%arg0: i32, %arg1: i32) -> (i32, i32) {
    %c0_i32 = arith.constant 0 : i32
    %c0_i32_0 = arith.constant 0 : i32
    %c0_i32_1 = arith.constant 0 : i32
    return %c0_i32, %c0_i32_0 : i32, i32
  }
  func.func @transform_2(%arg0: i32, %arg1: i32) -> (i32, i32, i32) {
    %c0_i32 = arith.constant 0 : i32
    %c0_i32_0 = arith.constant 0 : i32
    %c0_i32_1 = arith.constant 0 : i32
    return %arg0, %c0_i32, %c0_i32_0 : i32, i32, i32
  }
  func.func @transform_3(%arg0: i32, %arg1: i32) -> (i32, i32, i32) {
    %c0_i32 = arith.constant 0 : i32
    %c0_i32_0 = arith.constant 0 : i32
    return %arg0, %c0_i32, %arg1 : i32, i32, i32
  }
}

</mosaic_0001>

<llo_original>
// kernel: tpu_custom_call.1
$region0: #{tpu_custom_call.1}
  #allocation0 [shape = 'u32[]', space=smem, size = 0x4, offset = 0x4, fixed_abs, tag = 'smem constant byte address 0x4 - core index']
  #allocation1 [shape = 'u32[72,128]{1,0:T(1,128)}', space=vmem, size = 0x9000, scoped, tag = 'internal scratch']
  %s0 = inlined_call_operand.vmem [shape: f32[9,8,4], index: 0, kind: input, shape index: {}]
  %s1 = inlined_call_operand.vmem [shape: f32[8,1], index: 1, kind: input, shape index: {}]
  %s2 = inlined_call_operand.vmem [shape: f32[2,4,512], index: 2, kind: input, shape index: {}]
  %s3 = inlined_call_operand.hbm [shape: f32[2,8,384], index: 3, kind: output, shape index: {}]
  %s4 = sld [smem:[#allocation0]]
  $region45: #{tpu_custom_call.1} parent=0
    _
  %s6 = ssub.s32 1, %s4
  %s7 = scalar_select 0, %s6, %s4
  $region1: #{tpu_custom_call.1} parent=0
    #allocation2 [shape = 'u8[24576]{0}', space=vmem, size = 0x6000, scoped, tag = 'output window, operand 0']
    #allocation3 [shape = 's32[2]{0}', space=sflag, size = 0x8, scoped, tag = 'scoped memory for tpu_custom_call.1']
    %8 = vsyncpa [#allocation3], 0
    %s9 = scalar_lea.sflag [#allocation3], 1
    %10 = vsyncpa %s9, 0
    loop: start=0, step=1, limit=4
    $region2: #{tpu_custom_call.1} parent=1 // loop_pre_header
      _
    $region3: #{tpu_custom_call.1} parent=1 // loop_header
      %s12 = sphi 0, %s16
      %p13 = scmp.ge.s32.totalorder %s12, 4
      %s19 = sphi 0, %s31
      %s20 = sphi 0, %s27
      %s21 = sphi 0, %s19
      %s22 = sphi 0, %s20
      %s23 = sphi 0, %s21
      %s24 = sphi 0, %s22
      %s32 = sphi 0, %s32
      %s34 = sphi 0, %s32
      %s35 = sphi 0, %s34
      %s49 = sphi 0, %s35
      %s53 = sphi 0, %s53
      %s55 = sphi 0, %s53
      %s56 = sphi 0, %s55
      %s70 = sphi 0, %s56
      %s76 = sphi 0, %s78
      %s79 = sphi 0, %s76
      %s80 = sphi 0, %s79
      %s96 = sphi 0, %s80
      %s104 = sphi 0, %s106
      %s107 = sphi 0, %s104
      %s108 = sphi 0, %s107
      %s124 = sphi 0, %s108
    $region4: #{tpu_custom_call.1} parent=1 // loop_header_branch
      %15 = sbr.rel (%p13) target = $region8
    $region5: #{tpu_custom_call.1} parent=1 // loop_body
      %s17 = ssub.s32 %s12, 1
      %s18 = ssub.s32 %s12, 2
      %s25 = sadd.s32 1, %s20
      %p26 = scmp.ge.s32.totalorder %s25, 1
      %s27 = scalar_select %p26, 0, %s25
      %s28 = sadd.s32 1, %s19
      %s29 = scalar_select %p26, %s28, %s19
      %p30 = scmp.ge.s32.totalorder %s29, 2
      %s31 = scalar_select %p30, 0, %s29
      %s33 = sadd.s32 %s32, 1
      %p36 = scmp.eq.s32.totalorder %s12, 1
      %p37 = scmp.ne.s32.totalorder %s32, %s34
      %p38 = scmp.eq.s32.totalorder %s12, 0
      %p39 = por %p37, %p38
      %p40 = scmp.ne.s32.totalorder %s32, %s34
      %p41 = scmp.eq.s32.totalorder %s17, 1
      %p42 = por %p40, %p41
      %p43 = scmp.ne.s32.totalorder %s34, %s35
      %p44 = scmp.eq.s32.totalorder %s17, 0
      %p45 = por %p43, %p44
      %p46 = scmp.ne.s32.totalorder %s34, %s35
      %p47 = scmp.eq.s32.totalorder %s18, 1
      %p48 = por %p46, %p47
      %p50 = scmp.ne.s32.totalorder %s35, %s49
      %p51 = scmp.eq.s32.totalorder %s18, 0
      %p52 = por %p50, %p51
      %s54 = sadd.s32 %s53, 1
      %p57 = scmp.eq.s32.totalorder %s12, 1
      %p58 = scmp.ne.s32.totalorder %s53, %s55
      %p59 = scmp.eq.s32.totalorder %s12, 0
      %p60 = por %p58, %p59
      %p61 = scmp.ne.s32.totalorder %s53, %s55
      %p62 = scmp.eq.s32.totalorder %s17, 1
      %p63 = por %p61, %p62
      %p64 = scmp.ne.s32.totalorder %s55, %s56
      %p65 = scmp.eq.s32.totalorder %s17, 0
      %p66 = por %p64, %p65
      %p67 = scmp.ne.s32.totalorder %s55, %s56
      %p68 = scmp.eq.s32.totalorder %s18, 1
      %p69 = por %p67, %p68
      %p71 = scmp.ne.s32.totalorder %s56, %s70
      %p72 = scmp.eq.s32.totalorder %s18, 0
      %p73 = por %p71, %p72
      %s74 = ssub.s32 %s19, %s31
      %p75 = scmp.eq.s32.totalorder %s74, 0
      %s77 = sadd.s32 %s76, 1
      %s78 = scalar_select %p75, %s76, %s77
      %p81 = pneg %p75
      %p82 = scmp.eq.s32.totalorder %s12, 1
      %p83 = por %p81, %p82
      %p84 = scmp.ne.s32.totalorder %s76, %s79
      %p85 = scmp.eq.s32.totalorder %s12, 0
      %p86 = por %p84, %p85
      %p87 = scmp.ne.s32.totalorder %s76, %s79
      %p88 = scmp.eq.s32.totalorder %s17, 1
      %p89 = por %p87, %p88
      %p90 = scmp.ne.s32.totalorder %s79, %s80
      %p91 = scmp.eq.s32.totalorder %s17, 0
      %p92 = por %p90, %p91
      %p93 = scmp.ne.s32.totalorder %s79, %s80
      %p94 = scmp.eq.s32.totalorder %s18, 1
      %p95 = por %p93, %p94
      %p97 = scmp.ne.s32.totalorder %s80, %s96
      %p98 = scmp.eq.s32.totalorder %s18, 0
      %p99 = por %p97, %p98
      %s100 = ssub.s32 %s19, %s31
      %s101 = ssub.s32 %s20, %s27
      %s102 = sor.u32 %s100, %s101
      %p103 = scmp.eq.s32.totalorder %s102, 0
      %s105 = sadd.s32 %s104, 1
      %s106 = scalar_select %p103, %s104, %s105
      %p109 = pneg %p103
      %p110 = scmp.eq.s32.totalorder %s12, 1
      %p111 = por %p109, %p110
      %p112 = scmp.ne.s32.totalorder %s104, %s107
      %p113 = scmp.eq.s32.totalorder %s12, 0
      %p114 = por %p112, %p113
      %p115 = scmp.ne.s32.totalorder %s104, %s107
      %p116 = scmp.eq.s32.totalorder %s17, 1
      %p117 = por %p115, %p116
      %p118 = scmp.ne.s32.totalorder %s107, %s108
      %p119 = scmp.eq.s32.totalorder %s17, 0
      %p120 = por %p118, %p119
      %p121 = scmp.ne.s32.totalorder %s107, %s108
      %p122 = scmp.eq.s32.totalorder %s18, 1
      %p123 = por %p121, %p122
      %p125 = scmp.ne.s32.totalorder %s108, %s124
      %p126 = scmp.eq.s32.totalorder %s18, 0
      %p127 = por %p125, %p126
      %p128 = scmp.le.s32.totalorder 1, %s12
      %p129 = scmp.lt.s32.totalorder %s12, 3
      %p130 = pnand %p128, %p129
      %p131 = pneg %p130
      // Predicated region
      $region9: #{tpu_custom_call.1} parent=5 // pred_check
        _
      $region10: #{tpu_custom_call.1} parent=5 // pred_check_branch
        %133 = sbr.rel (%p130) target = $region12
      $region11: #{tpu_custom_call.1} parent=5 // pred_region
        %s134 = ssub.s32 %s12, 1
        // Predicated region
        $region13: #{tpu_custom_call.1} parent=11 // pred_check
          %p135 = pneg %p45
        $region14: #{tpu_custom_call.1} parent=11 // pred_check_branch
          %137 = sbr.rel (%p135) target = $region16
        $region15: #{tpu_custom_call.1} parent=11 // pred_region
          _
        $region16: #{tpu_custom_call.1} parent=11 // pred_fallthru
          _
        // Predicated region
        $region17: #{tpu_custom_call.1} parent=11 // pred_check
          %p138 = pneg %p66
        $region18: #{tpu_custom_call.1} parent=11 // pred_check_branch
          %140 = sbr.rel (%p138) target = $region20
        $region19: #{tpu_custom_call.1} parent=11 // pred_region
          _
        $region20: #{tpu_custom_call.1} parent=11 // pred_fallthru
          _
      $region12: #{tpu_custom_call.1} parent=5 // pred_fallthru
        _
      %p141 = scmp.lt.s32.totalorder %s12, 2
      // Predicated region
      $region21: #{tpu_custom_call.1} parent=5 // pred_check
        %p142 = pneg %p141
      $region22: #{tpu_custom_call.1} parent=5 // pred_check_branch
        %144 = sbr.rel (%p142) target = $region24
      $region23: #{tpu_custom_call.1} parent=5 // pred_region
        // Predicated region
        $region25: #{tpu_custom_call.1} parent=23 // pred_check
          %p145 = pneg %p86
        $region26: #{tpu_custom_call.1} parent=23 // pred_check_branch
          %147 = sbr.rel (%p145) target = $region28
        $region27: #{tpu_custom_call.1} parent=23 // pred_region
          %p148 = scmp.lt.s32.totalorder %s19, 1
          %s149 = scalar_select %p148, %s19, 1
          %s150 = smul.addr %s149, 4
          %s151 = smul.addr %s150, 4
          %s152 = scalar_lea.vmem %s2, %s151
        $region28: #{tpu_custom_call.1} parent=23 // pred_fallthru
          _
      $region24: #{tpu_custom_call.1} parent=5 // pred_fallthru
        _
      %p153 = scmp.le.s32.totalorder 1, %s12
      %p154 = scmp.lt.s32.totalorder %s12, 3
      %p155 = pnand %p153, %p154
      %p156 = pneg %p155
      // Predicated region
      $region29: #{tpu_custom_call.1} parent=5 // pred_check
        _
      $region30: #{tpu_custom_call.1} parent=5 // pred_check_branch
        %158 = sbr.rel (%p155) target = $region32
      $region31: #{tpu_custom_call.1} parent=5 // pred_region
        %s159 = ssub.s32 %s12, 1
        %p160 = pneg %p45
        %p161 = pneg %p42
        %p162 = pneg %p66
        %p163 = pneg %p63
        %p164 = scmp.lt.s32.totalorder %s21, 1
        %s165 = scalar_select %p164, %s21, 1
        %s166 = smul.addr %s165, 4
        %s167 = smul.addr %s166, 4
        %s168 = scalar_lea.vmem %s2, %s167
        %p169 = pneg %p92
        %p170 = pneg %p89
        %p171 = pneg %p120
        %p172 = pneg %p117
        %s173 = sand.u32 %s107, 1
        %s174 = scalar_lea.sflag [#allocation3], %s173
        %s175 = sand.u32 %s107, 1
        %s176 = smul.addr %s175, 24
        %s177 = scalar_lea.vmem [#allocation2], %s176
        %p178 = scmp.lt.s32.totalorder %s21, 1
        %s179 = scalar_select %p178, %s21, 1
        %s180 = smul.addr %s179, 4
        %s181 = smul.addr %s180, 4
        %s182 = scalar_lea.vmem %s2, %s181
        %s183 = smul.u32 3, %s22
        %v184 = vld [vmem:[%s1] sm:$0xff]
        %186 = vset.pattern.permute.xlu0 0
        %187 = vperm.xlu0 %186, %v184
        %v188 = vpop.permute.xlu0 %187
        %v190 = vld [vmem:[%s182] sm:$0xff]
        %v191 = vld [vmem:[%s182 + $0x8] sm:$0xf]
        %v192 = vld [vmem:[%s0] sm:$0xff]
        %195 = vst [vmem:[#allocation1] ss:$2 sm:$0xff] %v190
        %s196 = scalar_lea.vmem [#allocation1], 16
        %197 = vst [vmem:[%s196] ss:$2 sm:$0xff] %v191
        %v198 = vld.sshfl [vmem:[#allocation1] sm:$0xff pattern:$0x75316420]
        %v199 = vld.sshfl [vmem:[#allocation1 + $0x8] sm:$0xff pattern:$0x75316420]
        %v200 = vld.sshfl [vmem:[#allocation1 + $0x10] sm:$0xff pattern:$0x75316420]
        %vm201 = vcmask 31744
        %v203 = vsel %vm201, %v192, 0
        %vm205 = vcmask 1043456
        %v206 = vsel %vm205, %v198, 0
        %v208 = vsel %vm205, %v199, 0
        %v210 = vsel %vm205, %v200, 0
        %212 = vmatpush.msra.mxu0 0.0
        %213 = vmatpush.msra.mxu0 0.0
        %214 = vmatpush.msra.mxu0 0.0
        %215 = vmatpush.msra.mxu0 0.0
        %216 = vmatpush.msra.mxu0 0.0
        %217 = vmatpush.msra.mxu0 0.0
        %218 = vmatpush.msra.mxu0 0.0
        %219 = vmatpush.msra.mxu0 0.0
        %220 = vmatpush.msra.mxu0 0.0
        %221 = vmatpush.msra.mxu0 0.0
        %222 = vmatpush.msra.mxu0 0.0
        %223 = vmatpush.msra.mxu0 0.0
        %224 = vmatpush.msra.mxu0 0.0
        %225 = vmatpush.msra.mxu0 0.0
        %226 = vmatpush.msra.mxu0 0.0
        %227 = vmatpush.msra.mxu0 %v206
        %228 = vmatmul.f32.gmra.mxu0 %v203
        %v229 = vpop.f32.mrf.mxu0
        %v230 = vadd.f32 0.0, %v229
        %231 = vdwg.mxu0
        %232 = vmatpush.msra.mxu0 0.0
        %233 = vmatpush.msra.mxu0 0.0
        %234 = vmatpush.msra.mxu0 0.0
        %235 = vmatpush.msra.mxu0 0.0
        %236 = vmatpush.msra.mxu0 0.0
        %237 = vmatpush.msra.mxu0 0.0
        %238 = vmatpush.msra.mxu0 0.0
        %239 = vmatpush.msra.mxu0 0.0
        %240 = vmatpush.msra.mxu0 0.0
        %241 = vmatpush.msra.mxu0 0.0
        %242 = vmatpush.msra.mxu0 0.0
        %243 = vmatpush.msra.mxu0 0.0
        %244 = vmatpush.msra.mxu0 0.0
        %245 = vmatpush.msra.mxu0 0.0
        %246 = vmatpush.msra.mxu0 0.0
        %247 = vmatpush.msra.mxu0 %v208
        %248 = vmatmul.f32.gmra.mxu0 %v203
        %v249 = vpop.f32.mrf.mxu0
        %v250 = vadd.f32 0.0, %v249
        %251 = vdwg.mxu0
        %252 = vmatpush.msra.mxu0 0.0
        %253 = vmatpush.msra.mxu0 0.0
        %254 = vmatpush.msra.mxu0 0.0
        %255 = vmatpush.msra.mxu0 0.0
        %256 = vmatpush.msra.mxu0 0.0
        %257 = vmatpush.msra.mxu0 0.0
        %258 = vmatpush.msra.mxu0 0.0
        %259 = vmatpush.msra.mxu0 0.0
        %260 = vmatpush.msra.mxu0 0.0
        %261 = vmatpush.msra.mxu0 0.0
        %262 = vmatpush.msra.mxu0 0.0
        %263 = vmatpush.msra.mxu0 0.0
        %264 = vmatpush.msra.mxu0 0.0
        %265 = vmatpush.msra.mxu0 0.0
        %266 = vmatpush.msra.mxu0 0.0
        %267 = vmatpush.msra.mxu0 %v210
        %268 = vmatmul.f32.gmra.mxu0 %v203
        %v269 = vpop.f32.mrf.mxu0
        %v270 = vadd.f32 0.0, %v269
        %271 = vdwg.mxu0
        %v272 = vadd.f32 %v188, %v230
        %v273 = vadd.f32 %v188, %v250
        %v274 = vadd.f32 %v188, %v270
        %v275 = vld [vmem:[%s182] sm:$0xff]
        %v276 = vld [vmem:[%s182 + $0x8] sm:$0xff]
        %s277 = scalar_lea.vmem %s0, 8
        %v278 = vld [vmem:[%s277] sm:$0xff]
        %281 = vst [vmem:[#allocation1] ss:$2 sm:$0xff] %v275
        %s282 = scalar_lea.vmem [#allocation1], 16
        %283 = vst [vmem:[%s282] ss:$2 sm:$0xff] %v276
        %v284 = vld.sshfl [vmem:[#allocation1] sm:$0xff pattern:$0x75316420]
        %v285 = vld.sshfl [vmem:[#allocation1 + $0x8] sm:$0xff pattern:$0x75316420]
        %v286 = vld.sshfl [vmem:[#allocation1 + $0x10] sm:$0xff pattern:$0x75316420]
        %v287 = vld.sshfl [vmem:[#allocation1 + $0x18] sm:$0xff pattern:$0x75316420]
        %288 = vrot.lane.b32.xlu0 %v284, 127
        %v289 = vpop.permute.xlu0 %288
        %290 = vrot.lane.b32.xlu0 %v285, 127
        %v291 = vpop.permute.xlu0 %290
        %292 = vrot.lane.b32.xlu0 %v286, 127
        %v293 = vpop.permute.xlu0 %292
        %294 = vrot.lane.b32.xlu0 %v287, 127
        %v295 = vpop.permute.xlu0 %294
        %vm296 = vcmask 1039360
        %v297 = vsel %vm296, %v289, %v291
        %v298 = vsel %vm296, %v291, %v293
        %v299 = vsel %vm296, %v293, %v295
        %v301 = vsel %vm201, %v278, 0
        %v303 = vsel %vm205, %v297, 0
        %v305 = vsel %vm205, %v298, 0
        %v307 = vsel %vm205, %v299, 0
        %309 = vmatpush.msra.mxu0 0.0
        %310 = vmatpush.msra.mxu0 0.0
        %311 = vmatpush.msra.mxu0 0.0
        %312 = vmatpush.msra.mxu0 0.0
        %313 = vmatpush.msra.mxu0 0.0
        %314 = vmatpush.msra.mxu0 0.0
        %315 = vmatpush.msra.mxu0 0.0
        %316 = vmatpush.msra.mxu0 0.0
        %317 = vmatpush.msra.mxu0 0.0
        %318 = vmatpush.msra.mxu0 0.0
        %319 = vmatpush.msra.mxu0 0.0
        %320 = vmatpush.msra.mxu0 0.0
        %321 = vmatpush.msra.mxu0 0.0
        %322 = vmatpush.msra.mxu0 0.0
        %323 = vmatpush.msra.mxu0 0.0
        %324 = vmatpush.msra.mxu0 %v303
        %325 = vmatmul.f32.gmra.mxu0 %v301
        %v326 = vpop.f32.mrf.mxu0
        %v327 = vadd.f32 0.0, %v326
        %328 = vdwg.mxu0
        %329 = vmatpush.msra.mxu0 0.0
        %330 = vmatpush.msra.mxu0 0.0
        %331 = vmatpush.msra.mxu0 0.0
        %332 = vmatpush.msra.mxu0 0.0
        %333 = vmatpush.msra.mxu0 0.0
        %334 = vmatpush.msra.mxu0 0.0
        %335 = vmatpush.msra.mxu0 0.0
        %336 = vmatpush.msra.mxu0 0.0
        %337 = vmatpush.msra.mxu0 0.0
        %338 = vmatpush.msra.mxu0 0.0
        %339 = vmatpush.msra.mxu0 0.0
        %340 = vmatpush.msra.mxu0 0.0
        %341 = vmatpush.msra.mxu0 0.0
        %342 = vmatpush.msra.mxu0 0.0
        %343 = vmatpush.msra.mxu0 0.0
        %344 = vmatpush.msra.mxu0 %v305
        %345 = vmatmul.f32.gmra.mxu0 %v301
        %v346 = vpop.f32.mrf.mxu0
        %v347 = vadd.f32 0.0, %v346
        %348 = vdwg.mxu0
        %349 = vmatpush.msra.mxu0 0.0
        %350 = vmatpush.msra.mxu0 0.0
        %351 = vmatpush.msra.mxu0 0.0
        %352 = vmatpush.msra.mxu0 0.0
        %353 = vmatpush.msra.mxu0 0.0
        %354 = vmatpush.msra.mxu0 0.0
        %355 = vmatpush.msra.mxu0 0.0
        %356 = vmatpush.msra.mxu0 0.0
        %357 = vmatpush.msra.mxu0 0.0
        %358 = vmatpush.msra.mxu0 0.0
        %359 = vmatpush.msra.mxu0 0.0
        %360 = vmatpush.msra.mxu0 0.0
        %361 = vmatpush.msra.mxu0 0.0
        %362 = vmatpush.msra.mxu0 0.0
        %363 = vmatpush.msra.mxu0 0.0
        %364 = vmatpush.msra.mxu0 %v307
        %365 = vmatmul.f32.gmra.mxu0 %v301
        %v366 = vpop.f32.mrf.mxu0
        %v367 = vadd.f32 0.0, %v366
        %368 = vdwg.mxu0
        %v369 = vadd.f32 %v272, %v327
        %v370 = vadd.f32 %v273, %v347
        %v371 = vadd.f32 %v274, %v367
        %v372 = vld [vmem:[%s182] sm:$0xff]
        %v373 = vld [vmem:[%s182 + $0x8] sm:$0xff]
        %s374 = scalar_lea.vmem %s0, 16
        %v375 = vld [vmem:[%s374] sm:$0xff]
        %378 = vst [vmem:[#allocation1] ss:$2 sm:$0xff] %v372
        %s379 = scalar_lea.vmem [#allocation1], 16
        %380 = vst [vmem:[%s379] ss:$2 sm:$0xff] %v373
        %v381 = vld.sshfl [vmem:[#allocation1] sm:$0xff pattern:$0x75316420]
        %v382 = vld.sshfl [vmem:[#allocation1 + $0x8] sm:$0xff pattern:$0x75316420]
        %v383 = vld.sshfl [vmem:[#allocation1 + $0x10] sm:$0xff pattern:$0x75316420]
        %v384 = vld.sshfl [vmem:[#allocation1 + $0x18] sm:$0xff pattern:$0x75316420]
        %385 = vrot.lane.b32.xlu0 %v381, 126
        %v386 = vpop.permute.xlu0 %385
        %387 = vrot.lane.b32.xlu0 %v382, 126
        %v388 = vpop.permute.xlu0 %387
        %389 = vrot.lane.b32.xlu0 %v383, 126
        %v390 = vpop.permute.xlu0 %389
        %391 = vrot.lane.b32.xlu0 %v384, 126
        %v392 = vpop.permute.xlu0 %391
        %vm393 = vcmask 1031168
        %v394 = vsel %vm393, %v386, %v388
        %v395 = vsel %vm393, %v388, %v390
        %v396 = vsel %vm393, %v390, %v392
        %v398 = vsel %vm201, %v375, 0
        %v400 = vsel %vm205, %v394, 0
        %v402 = vsel %vm205, %v395, 0
        %v404 = vsel %vm205, %v396, 0
        %406 = vmatpush.msra.mxu0 0.0
        %407 = vmatpush.msra.mxu0 0.0
        %408 = vmatpush.msra.mxu0 0.0
        %409 = vmatpush.msra.mxu0 0.0
        %410 = vmatpush.msra.mxu0 0.0
        %411 = vmatpush.msra.mxu0 0.0
        %412 = vmatpush.msra.mxu0 0.0
        %413 = vmatpush.msra.mxu0 0.0
        %414 = vmatpush.msra.mxu0 0.0
        %415 = vmatpush.msra.mxu0 0.0
        %416 = vmatpush.msra.mxu0 0.0
        %417 = vmatpush.msra.mxu0 0.0
        %418 = vmatpush.msra.mxu0 0.0
        %419 = vmatpush.msra.mxu0 0.0
        %420 = vmatpush.msra.mxu0 0.0
        %421 = vmatpush.msra.mxu0 %v400
        %422 = vmatmul.f32.gmra.mxu0 %v398
        %v423 = vpop.f32.mrf.mxu0
        %v424 = vadd.f32 0.0, %v423
        %425 = vdwg.mxu0
        %426 = vmatpush.msra.mxu0 0.0
        %427 = vmatpush.msra.mxu0 0.0
        %428 = vmatpush.msra.mxu0 0.0
        %429 = vmatpush.msra.mxu0 0.0
        %430 = vmatpush.msra.mxu0 0.0
        %431 = vmatpush.msra.mxu0 0.0
        %432 = vmatpush.msra.mxu0 0.0
        %433 = vmatpush.msra.mxu0 0.0
        %434 = vmatpush.msra.mxu0 0.0
        %435 = vmatpush.msra.mxu0 0.0
        %436 = vmatpush.msra.mxu0 0.0
        %437 = vmatpush.msra.mxu0 0.0
        %438 = vmatpush.msra.mxu0 0.0
        %439 = vmatpush.msra.mxu0 0.0
        %440 = vmatpush.msra.mxu0 0.0
        %441 = vmatpush.msra.mxu0 %v402
        %442 = vmatmul.f32.gmra.mxu0 %v398
        %v443 = vpop.f32.mrf.mxu0
        %v444 = vadd.f32 0.0, %v443
        %445 = vdwg.mxu0
        %446 = vmatpush.msra.mxu0 0.0
        %447 = vmatpush.msra.mxu0 0.0
        %448 = vmatpush.msra.mxu0 0.0
        %449 = vmatpush.msra.mxu0 0.0
        %450 = vmatpush.msra.mxu0 0.0
        %451 = vmatpush.msra.mxu0 0.0
        %452 = vmatpush.msra.mxu0 0.0
        %453 = vmatpush.msra.mxu0 0.0
        %454 = vmatpush.msra.mxu0 0.0
        %455 = vmatpush.msra.mxu0 0.0
        %456 = vmatpush.msra.mxu0 0.0
        %457 = vmatpush.msra.mxu0 0.0
        %458 = vmatpush.msra.mxu0 0.0
        %459 = vmatpush.msra.mxu0 0.0
        %460 = vmatpush.msra.mxu0 0.0
        %461 = vmatpush.msra.mxu0 %v404
        %462 = vmatmul.f32.gmra.mxu0 %v398
        %v463 = vpop.f32.mrf.mxu0
        %v464 = vadd.f32 0.0, %v463
        %465 = vdwg.mxu0
        %v466 = vadd.f32 %v369, %v424
        %v467 = vadd.f32 %v370, %v444
        %v468 = vadd.f32 %v371, %v464
        %v469 = vld [vmem:[%s182] sm:$0xff]
        %v470 = vld [vmem:[%s182 + $0x8] sm:$0xff]
        %s471 = scalar_lea.vmem %s0, 24
        %v472 = vld [vmem:[%s471] sm:$0xff]
        %475 = vst [vmem:[#allocation1] ss:$2 sm:$0xff] %v469
        %s476 = scalar_lea.vmem [#allocation1], 16
        %477 = vst [vmem:[%s476] ss:$2 sm:$0xff] %v470
        %v478 = vld.sshfl [vmem:[#allocation1] sm:$0xff pattern:$0x75316420]
        %v479 = vld.sshfl [vmem:[#allocation1 + $0x8] sm:$0xff pattern:$0x75316420]
        %v480 = vld.sshfl [vmem:[#allocation1 + $0x10] sm:$0xff pattern:$0x75316420]
        %v481 = vld.sshfl [vmem:[#allocation1 + $0x18] sm:$0xff pattern:$0x75316420]
        %482 = vrot.lane.b32.xlu0 %v478, 110
        %v483 = vpop.permute.xlu0 %482
        %484 = vrot.lane.b32.xlu0 %v479, 110
        %v485 = vpop.permute.xlu0 %484
        %486 = vrot.lane.b32.xlu0 %v480, 110
        %v487 = vpop.permute.xlu0 %486
        %488 = vrot.lane.b32.xlu0 %v481, 110
        %v489 = vpop.permute.xlu0 %488
        %vm490 = vcmask 900096
        %v491 = vsel %vm490, %v483, %v485
        %v492 = vsel %vm490, %v485, %v487
        %v493 = vsel %vm490, %v487, %v489
        %v495 = vsel %vm201, %v472, 0
        %v497 = vsel %vm205, %v491, 0
        %v499 = vsel %vm205, %v492, 0
        %v501 = vsel %vm205, %v493, 0
        %503 = vmatpush.msra.mxu0 0.0
        %504 = vmatpush.msra.mxu0 0.0
        %505 = vmatpush.msra.mxu0 0.0
        %506 = vmatpush.msra.mxu0 0.0
        %507 = vmatpush.msra.mxu0 0.0
        %508 = vmatpush.msra.mxu0 0.0
        %509 = vmatpush.msra.mxu0 0.0
        %510 = vmatpush.msra.mxu0 0.0
        %511 = vmatpush.msra.mxu0 0.0
        %512 = vmatpush.msra.mxu0 0.0
        %513 = vmatpush.msra.mxu0 0.0
        %514 = vmatpush.msra.mxu0 0.0
        %515 = vmatpush.msra.mxu0 0.0
        %516 = vmatpush.msra.mxu0 0.0
        %517 = vmatpush.msra.mxu0 0.0
        %518 = vmatpush.msra.mxu0 %v497
        %519 = vmatmul.f32.gmra.mxu0 %v495
        %v520 = vpop.f32.mrf.mxu0
        %v521 = vadd.f32 0.0, %v520
        %522 = vdwg.mxu0
        %523 = vmatpush.msra.mxu0 0.0
        %524 = vmatpush.msra.mxu0 0.0
        %525 = vmatpush.msra.mxu0 0.0
        %526 = vmatpush.msra.mxu0 0.0
        %527 = vmatpush.msra.mxu0 0.0
        %528 = vmatpush.msra.mxu0 0.0
        %529 = vmatpush.msra.mxu0 0.0
        %530 = vmatpush.msra.mxu0 0.0
        %531 = vmatpush.msra.mxu0 0.0
        %532 = vmatpush.msra.mxu0 0.0
        %533 = vmatpush.msra.mxu0 0.0
        %534 = vmatpush.msra.mxu0 0.0
        %535 = vmatpush.msra.mxu0 0.0
        %536 = vmatpush.msra.mxu0 0.0
        %537 = vmatpush.msra.mxu0 0.0
        %538 = vmatpush.msra.mxu0 %v499
        %539 = vmatmul.f32.gmra.mxu0 %v495
        %v540 = vpop.f32.mrf.mxu0
        %v541 = vadd.f32 0.0, %v540
        %542 = vdwg.mxu0
        %543 = vmatpush.msra.mxu0 0.0
        %544 = vmatpush.msra.mxu0 0.0
        %545 = vmatpush.msra.mxu0 0.0
        %546 = vmatpush.msra.mxu0 0.0
        %547 = vmatpush.msra.mxu0 0.0
        %548 = vmatpush.msra.mxu0 0.0
        %549 = vmatpush.msra.mxu0 0.0
        %550 = vmatpush.msra.mxu0 0.0
        %551 = vmatpush.msra.mxu0 0.0
        %552 = vmatpush.msra.mxu0 0.0
        %553 = vmatpush.msra.mxu0 0.0
        %554 = vmatpush.msra.mxu0 0.0
        %555 = vmatpush.msra.mxu0 0.0
        %556 = vmatpush.msra.mxu0 0.0
        %557 = vmatpush.msra.mxu0 0.0
        %558 = vmatpush.msra.mxu0 %v501
        %559 = vmatmul.f32.gmra.mxu0 %v495
        %v560 = vpop.f32.mrf.mxu0
        %v561 = vadd.f32 0.0, %v560
        %562 = vdwg.mxu0
        %v563 = vadd.f32 %v466, %v521
        %v564 = vadd.f32 %v467, %v541
        %v565 = vadd.f32 %v468, %v561
        %v566 = vld [vmem:[%s182] sm:$0xff]
        %v567 = vld [vmem:[%s182 + $0x8] sm:$0xff]
        %s568 = scalar_lea.vmem %s0, 32
        %v569 = vld [vmem:[%s568] sm:$0xff]
        %572 = vst [vmem:[#allocation1] ss:$2 sm:$0xff] %v566
        %s573 = scalar_lea.vmem [#allocation1], 16
        %574 = vst [vmem:[%s573] ss:$2 sm:$0xff] %v567
        %v575 = vld.sshfl [vmem:[#allocation1] sm:$0xff pattern:$0x75316420]
        %v576 = vld.sshfl [vmem:[#allocation1 + $0x8] sm:$0xff pattern:$0x75316420]
        %v577 = vld.sshfl [vmem:[#allocation1 + $0x10] sm:$0xff pattern:$0x75316420]
        %v578 = vld.sshfl [vmem:[#allocation1 + $0x18] sm:$0xff pattern:$0x75316420]
        %579 = vrot.lane.b32.xlu0 %v575, 109
        %v580 = vpop.permute.xlu0 %579
        %581 = vrot.lane.b32.xlu0 %v576, 109
        %v582 = vpop.permute.xlu0 %581
        %583 = vrot.lane.b32.xlu0 %v577, 109
        %v584 = vpop.permute.xlu0 %583
        %585 = vrot.lane.b32.xlu0 %v578, 109
        %v586 = vpop.permute.xlu0 %585
        %vm587 = vcmask 891904
        %v588 = vsel %vm587, %v580, %v582
        %v589 = vsel %vm587, %v582, %v584
        %v590 = vsel %vm587, %v584, %v586
        %v592 = vsel %vm201, %v569, 0
        %v594 = vsel %vm205, %v588, 0
        %v596 = vsel %vm205, %v589, 0
        %v598 = vsel %vm205, %v590, 0
        %600 = vmatpush.msra.mxu0 0.0
        %601 = vmatpush.msra.mxu0 0.0
        %602 = vmatpush.msra.mxu0 0.0
        %603 = vmatpush.msra.mxu0 0.0
        %604 = vmatpush.msra.mxu0 0.0
        %605 = vmatpush.msra.mxu0 0.0
        %606 = vmatpush.msra.mxu0 0.0
        %607 = vmatpush.msra.mxu0 0.0
        %608 = vmatpush.msra.mxu0 0.0
        %609 = vmatpush.msra.mxu0 0.0
        %610 = vmatpush.msra.mxu0 0.0
        %611 = vmatpush.msra.mxu0 0.0
        %612 = vmatpush.msra.mxu0 0.0
        %613 = vmatpush.msra.mxu0 0.0
        %614 = vmatpush.msra.mxu0 0.0
        %615 = vmatpush.msra.mxu0 %v594
        %616 = vmatmul.f32.gmra.mxu0 %v592
        %v617 = vpop.f32.mrf.mxu0
        %v618 = vadd.f32 0.0, %v617
        %619 = vdwg.mxu0
        %620 = vmatpush.msra.mxu0 0.0
        %621 = vmatpush.msra.mxu0 0.0
        %622 = vmatpush.msra.mxu0 0.0
        %623 = vmatpush.msra.mxu0 0.0
        %624 = vmatpush.msra.mxu0 0.0
        %625 = vmatpush.msra.mxu0 0.0
        %626 = vmatpush.msra.mxu0 0.0
        %627 = vmatpush.msra.mxu0 0.0
        %628 = vmatpush.msra.mxu0 0.0
        %629 = vmatpush.msra.mxu0 0.0
        %630 = vmatpush.msra.mxu0 0.0
        %631 = vmatpush.msra.mxu0 0.0
        %632 = vmatpush.msra.mxu0 0.0
        %633 = vmatpush.msra.mxu0 0.0
        %634 = vmatpush.msra.mxu0 0.0
        %635 = vmatpush.msra.mxu0 %v596
        %636 = vmatmul.f32.gmra.mxu0 %v592
        %v637 = vpop.f32.mrf.mxu0
        %v638 = vadd.f32 0.0, %v637
        %639 = vdwg.mxu0
        %640 = vmatpush.msra.mxu0 0.0
        %641 = vmatpush.msra.mxu0 0.0
        %642 = vmatpush.msra.mxu0 0.0
        %643 = vmatpush.msra.mxu0 0.0
        %644 = vmatpush.msra.mxu0 0.0
        %645 = vmatpush.msra.mxu0 0.0
        %646 = vmatpush.msra.mxu0 0.0
        %647 = vmatpush.msra.mxu0 0.0
        %648 = vmatpush.msra.mxu0 0.0
        %649 = vmatpush.msra.mxu0 0.0
        %650 = vmatpush.msra.mxu0 0.0
        %651 = vmatpush.msra.mxu0 0.0
        %652 = vmatpush.msra.mxu0 0.0
        %653 = vmatpush.msra.mxu0 0.0
        %654 = vmatpush.msra.mxu0 0.0
        %655 = vmatpush.msra.mxu0 %v598
        %656 = vmatmul.f32.gmra.mxu0 %v592
        %v657 = vpop.f32.mrf.mxu0
        %v658 = vadd.f32 0.0, %v657
        %659 = vdwg.mxu0
        %v660 = vadd.f32 %v563, %v618
        %v661 = vadd.f32 %v564, %v638
        %v662 = vadd.f32 %v565, %v658
        %v663 = vld [vmem:[%s182] sm:$0xff]
        %v664 = vld [vmem:[%s182 + $0x8] sm:$0xff]
        %s665 = scalar_lea.vmem %s0, 40
        %v666 = vld [vmem:[%s665] sm:$0xff]
        %669 = vst [vmem:[#allocation1] ss:$2 sm:$0xff] %v663
        %s670 = scalar_lea.vmem [#allocation1], 16
        %671 = vst [vmem:[%s670] ss:$2 sm:$0xff] %v664
        %v672 = vld.sshfl [vmem:[#allocation1] sm:$0xff pattern:$0x75316420]
        %v673 = vld.sshfl [vmem:[#allocation1 + $0x8] sm:$0xff pattern:$0x75316420]
        %v674 = vld.sshfl [vmem:[#allocation1 + $0x10] sm:$0xff pattern:$0x75316420]
        %v675 = vld.sshfl [vmem:[#allocation1 + $0x18] sm:$0xff pattern:$0x75316420]
        %676 = vrot.lane.b32.xlu0 %v672, 108
        %v677 = vpop.permute.xlu0 %676
        %678 = vrot.lane.b32.xlu0 %v673, 108
        %v679 = vpop.permute.xlu0 %678
        %680 = vrot.lane.b32.xlu0 %v674, 108
        %v681 = vpop.permute.xlu0 %680
        %682 = vrot.lane.b32.xlu0 %v675, 108
        %v683 = vpop.permute.xlu0 %682
        %vm684 = vcmask 883712
        %v685 = vsel %vm684, %v677, %v679
        %v686 = vsel %vm684, %v679, %v681
        %v687 = vsel %vm684, %v681, %v683
        %v689 = vsel %vm201, %v666, 0
        %v691 = vsel %vm205, %v685, 0
        %v693 = vsel %vm205, %v686, 0
        %v695 = vsel %vm205, %v687, 0
        %697 = vmatpush.msra.mxu0 0.0
        %698 = vmatpush.msra.mxu0 0.0
        %699 = vmatpush.msra.mxu0 0.0
        %700 = vmatpush.msra.mxu0 0.0
        %701 = vmatpush.msra.mxu0 0.0
        %702 = vmatpush.msra.mxu0 0.0
        %703 = vmatpush.msra.mxu0 0.0
        %704 = vmatpush.msra.mxu0 0.0
        %705 = vmatpush.msra.mxu0 0.0
        %706 = vmatpush.msra.mxu0 0.0
        %707 = vmatpush.msra.mxu0 0.0
        %708 = vmatpush.msra.mxu0 0.0
        %709 = vmatpush.msra.mxu0 0.0
        %710 = vmatpush.msra.mxu0 0.0
        %711 = vmatpush.msra.mxu0 0.0
        %712 = vmatpush.msra.mxu0 %v691
        %713 = vmatmul.f32.gmra.mxu0 %v689
        %v714 = vpop.f32.mrf.mxu0
        %v715 = vadd.f32 0.0, %v714
        %716 = vdwg.mxu0
        %717 = vmatpush.msra.mxu0 0.0
        %718 = vmatpush.msra.mxu0 0.0
        %719 = vmatpush.msra.mxu0 0.0
        %720 = vmatpush.msra.mxu0 0.0
        %721 = vmatpush.msra.mxu0 0.0
        %722 = vmatpush.msra.mxu0 0.0
        %723 = vmatpush.msra.mxu0 0.0
        %724 = vmatpush.msra.mxu0 0.0
        %725 = vmatpush.msra.mxu0 0.0
        %726 = vmatpush.msra.mxu0 0.0
        %727 = vmatpush.msra.mxu0 0.0
        %728 = vmatpush.msra.mxu0 0.0
        %729 = vmatpush.msra.mxu0 0.0
        %730 = vmatpush.msra.mxu0 0.0
        %731 = vmatpush.msra.mxu0 0.0
        %732 = vmatpush.msra.mxu0 %v693
        %733 = vmatmul.f32.gmra.mxu0 %v689
        %v734 = vpop.f32.mrf.mxu0
        %v735 = vadd.f32 0.0, %v734
        %736 = vdwg.mxu0
        %737 = vmatpush.msra.mxu0 0.0
        %738 = vmatpush.msra.mxu0 0.0
        %739 = vmatpush.msra.mxu0 0.0
        %740 = vmatpush.msra.mxu0 0.0
        %741 = vmatpush.msra.mxu0 0.0
        %742 = vmatpush.msra.mxu0 0.0
        %743 = vmatpush.msra.mxu0 0.0
        %744 = vmatpush.msra.mxu0 0.0
        %745 = vmatpush.msra.mxu0 0.0
        %746 = vmatpush.msra.mxu0 0.0
        %747 = vmatpush.msra.mxu0 0.0
        %748 = vmatpush.msra.mxu0 0.0
        %749 = vmatpush.msra.mxu0 0.0
        %750 = vmatpush.msra.mxu0 0.0
        %751 = vmatpush.msra.mxu0 0.0
        %752 = vmatpush.msra.mxu0 %v695
        %753 = vmatmul.f32.gmra.mxu0 %v689
        %v754 = vpop.f32.mrf.mxu0
        %v755 = vadd.f32 0.0, %v754
        %756 = vdwg.mxu0
        %v757 = vadd.f32 %v660, %v715
        %v758 = vadd.f32 %v661, %v735
        %v759 = vadd.f32 %v662, %v755
        %v760 = vld [vmem:[%s182] sm:$0xff]
        %v761 = vld [vmem:[%s182 + $0x8] sm:$0xff]
        %s762 = scalar_lea.vmem %s0, 48
        %v763 = vld [vmem:[%s762] sm:$0xff]
        %766 = vst [vmem:[#allocation1] ss:$2 sm:$0xff] %v760
        %s767 = scalar_lea.vmem [#allocation1], 16
        %768 = vst [vmem:[%s767] ss:$2 sm:$0xff] %v761
        %v769 = vld.sshfl [vmem:[#allocation1] sm:$0xff pattern:$0x75316420]
        %v770 = vld.sshfl [vmem:[#allocation1 + $0x8] sm:$0xff pattern:$0x75316420]
        %v771 = vld.sshfl [vmem:[#allocation1 + $0x10] sm:$0xff pattern:$0x75316420]
        %v772 = vld.sshfl [vmem:[#allocation1 + $0x18] sm:$0xff pattern:$0x75316420]
        %773 = vrot.lane.b32.xlu0 %v769, 92
        %v774 = vpop.permute.xlu0 %773
        %775 = vrot.lane.b32.xlu0 %v770, 92
        %v776 = vpop.permute.xlu0 %775
        %777 = vrot.lane.b32.xlu0 %v771, 92
        %v778 = vpop.permute.xlu0 %777
        %779 = vrot.lane.b32.xlu0 %v772, 92
        %v780 = vpop.permute.xlu0 %779
        %vm781 = vcmask 752640
        %v782 = vsel %vm781, %v774, %v776
        %v783 = vsel %vm781, %v776, %v778
        %v784 = vsel %vm781, %v778, %v780
        %v786 = vsel %vm201, %v763, 0
        %v788 = vsel %vm205, %v782, 0
        %v790 = vsel %vm205, %v783, 0
        %v792 = vsel %vm205, %v784, 0
        %794 = vmatpush.msra.mxu0 0.0
        %795 = vmatpush.msra.mxu0 0.0
        %796 = vmatpush.msra.mxu0 0.0
        %797 = vmatpush.msra.mxu0 0.0
        %798 = vmatpush.msra.mxu0 0.0
        %799 = vmatpush.msra.mxu0 0.0
        %800 = vmatpush.msra.mxu0 0.0
        %801 = vmatpush.msra.mxu0 0.0
        %802 = vmatpush.msra.mxu0 0.0
        %803 = vmatpush.msra.mxu0 0.0
        %804 = vmatpush.msra.mxu0 0.0
        %805 = vmatpush.msra.mxu0 0.0
        %806 = vmatpush.msra.mxu0 0.0
        %807 = vmatpush.msra.mxu0 0.0
        %808 = vmatpush.msra.mxu0 0.0
        %809 = vmatpush.msra.mxu0 %v788
        %810 = vmatmul.f32.gmra.mxu0 %v786
        %v811 = vpop.f32.mrf.mxu0
        %v812 = vadd.f32 0.0, %v811
        %813 = vdwg.mxu0
        %814 = vmatpush.msra.mxu0 0.0
        %815 = vmatpush.msra.mxu0 0.0
        %816 = vmatpush.msra.mxu0 0.0
        %817 = vmatpush.msra.mxu0 0.0
        %818 = vmatpush.msra.mxu0 0.0
        %819 = vmatpush.msra.mxu0 0.0
        %820 = vmatpush.msra.mxu0 0.0
        %821 = vmatpush.msra.mxu0 0.0
        %822 = vmatpush.msra.mxu0 0.0
        %823 = vmatpush.msra.mxu0 0.0
        %824 = vmatpush.msra.mxu0 0.0
        %825 = vmatpush.msra.mxu0 0.0
        %826 = vmatpush.msra.mxu0 0.0
        %827 = vmatpush.msra.mxu0 0.0
        %828 = vmatpush.msra.mxu0 0.0
        %829 = vmatpush.msra.mxu0 %v790
        %830 = vmatmul.f32.gmra.mxu0 %v786
        %v831 = vpop.f32.mrf.mxu0
        %v832 = vadd.f32 0.0, %v831
        %833 = vdwg.mxu0
        %834 = vmatpush.msra.mxu0 0.0
        %835 = vmatpush.msra.mxu0 0.0
        %836 = vmatpush.msra.mxu0 0.0
        %837 = vmatpush.msra.mxu0 0.0
        %838 = vmatpush.msra.mxu0 0.0
        %839 = vmatpush.msra.mxu0 0.0
        %840 = vmatpush.msra.mxu0 0.0
        %841 = vmatpush.msra.mxu0 0.0
        %842 = vmatpush.msra.mxu0 0.0
        %843 = vmatpush.msra.mxu0 0.0
        %844 = vmatpush.msra.mxu0 0.0
        %845 = vmatpush.msra.mxu0 0.0
        %846 = vmatpush.msra.mxu0 0.0
        %847 = vmatpush.msra.mxu0 0.0
        %848 = vmatpush.msra.mxu0 0.0
        %849 = vmatpush.msra.mxu0 %v792
        %850 = vmatmul.f32.gmra.mxu0 %v786
        %v851 = vpop.f32.mrf.mxu0
        %v852 = vadd.f32 0.0, %v851
        %853 = vdwg.mxu0
        %v854 = vadd.f32 %v757, %v812
        %v855 = vadd.f32 %v758, %v832
        %v856 = vadd.f32 %v759, %v852
        %v857 = vld [vmem:[%s182] sm:$0xff]
        %v858 = vld [vmem:[%s182 + $0x8] sm:$0xff]
        %s859 = scalar_lea.vmem %s0, 56
        %v860 = vld [vmem:[%s859] sm:$0xff]
        %863 = vst [vmem:[#allocation1] ss:$2 sm:$0xff] %v857
        %s864 = scalar_lea.vmem [#allocation1], 16
        %865 = vst [vmem:[%s864] ss:$2 sm:$0xff] %v858
        %v866 = vld.sshfl [vmem:[#allocation1] sm:$0xff pattern:$0x75316420]
        %v867 = vld.sshfl [vmem:[#allocation1 + $0x8] sm:$0xff pattern:$0x75316420]
        %v868 = vld.sshfl [vmem:[#allocation1 + $0x10] sm:$0xff pattern:$0x75316420]
        %v869 = vld.sshfl [vmem:[#allocation1 + $0x18] sm:$0xff pattern:$0x75316420]
        %870 = vrot.lane.b32.xlu0 %v866, 91
        %v871 = vpop.permute.xlu0 %870
        %872 = vrot.lane.b32.xlu0 %v867, 91
        %v873 = vpop.permute.xlu0 %872
        %874 = vrot.lane.b32.xlu0 %v868, 91
        %v875 = vpop.permute.xlu0 %874
        %876 = vrot.lane.b32.xlu0 %v869, 91
        %v877 = vpop.permute.xlu0 %876
        %vm878 = vcmask 744448
        %v879 = vsel %vm878, %v871, %v873
        %v880 = vsel %vm878, %v873, %v875
        %v881 = vsel %vm878, %v875, %v877
        %v883 = vsel %vm201, %v860, 0
        %v885 = vsel %vm205, %v879, 0
        %v887 = vsel %vm205, %v880, 0
        %v889 = vsel %vm205, %v881, 0
        %891 = vmatpush.msra.mxu0 0.0
        %892 = vmatpush.msra.mxu0 0.0
        %893 = vmatpush.msra.mxu0 0.0
        %894 = vmatpush.msra.mxu0 0.0
        %895 = vmatpush.msra.mxu0 0.0
        %896 = vmatpush.msra.mxu0 0.0
        %897 = vmatpush.msra.mxu0 0.0
        %898 = vmatpush.msra.mxu0 0.0
        %899 = vmatpush.msra.mxu0 0.0
        %900 = vmatpush.msra.mxu0 0.0
        %901 = vmatpush.msra.mxu0 0.0
        %902 = vmatpush.msra.mxu0 0.0
        %903 = vmatpush.msra.mxu0 0.0
        %904 = vmatpush.msra.mxu0 0.0
        %905 = vmatpush.msra.mxu0 0.0
        %906 = vmatpush.msra.mxu0 %v885
        %907 = vmatmul.f32.gmra.mxu0 %v883
        %v908 = vpop.f32.mrf.mxu0
        %v909 = vadd.f32 0.0, %v908
        %910 = vdwg.mxu0
        %911 = vmatpush.msra.mxu0 0.0
        %912 = vmatpush.msra.mxu0 0.0
        %913 = vmatpush.msra.mxu0 0.0
        %914 = vmatpush.msra.mxu0 0.0
        %915 = vmatpush.msra.mxu0 0.0
        %916 = vmatpush.msra.mxu0 0.0
        %917 = vmatpush.msra.mxu0 0.0
        %918 = vmatpush.msra.mxu0 0.0
        %919 = vmatpush.msra.mxu0 0.0
        %920 = vmatpush.msra.mxu0 0.0
        %921 = vmatpush.msra.mxu0 0.0
        %922 = vmatpush.msra.mxu0 0.0
        %923 = vmatpush.msra.mxu0 0.0
        %924 = vmatpush.msra.mxu0 0.0
        %925 = vmatpush.msra.mxu0 0.0
        %926 = vmatpush.msra.mxu0 %v887
        %927 = vmatmul.f32.gmra.mxu0 %v883
        %v928 = vpop.f32.mrf.mxu0
        %v929 = vadd.f32 0.0, %v928
        %930 = vdwg.mxu0
        %931 = vmatpush.msra.mxu0 0.0
        %932 = vmatpush.msra.mxu0 0.0
        %933 = vmatpush.msra.mxu0 0.0
        %934 = vmatpush.msra.mxu0 0.0
        %935 = vmatpush.msra.mxu0 0.0
        %936 = vmatpush.msra.mxu0 0.0
        %937 = vmatpush.msra.mxu0 0.0
        %938 = vmatpush.msra.mxu0 0.0
        %939 = vmatpush.msra.mxu0 0.0
        %940 = vmatpush.msra.mxu0 0.0
        %941 = vmatpush.msra.mxu0 0.0
        %942 = vmatpush.msra.mxu0 0.0
        %943 = vmatpush.msra.mxu0 0.0
        %944 = vmatpush.msra.mxu0 0.0
        %945 = vmatpush.msra.mxu0 0.0
        %946 = vmatpush.msra.mxu0 %v889
        %947 = vmatmul.f32.gmra.mxu0 %v883
        %v948 = vpop.f32.mrf.mxu0
        %v949 = vadd.f32 0.0, %v948
        %950 = vdwg.mxu0
        %v951 = vadd.f32 %v854, %v909
        %v952 = vadd.f32 %v855, %v929
        %v953 = vadd.f32 %v856, %v949
        %v954 = vld [vmem:[%s182] sm:$0xff]
        %v955 = vld [vmem:[%s182 + $0x8] sm:$0xff]
        %s956 = scalar_lea.vmem %s0, 64
        %v957 = vld [vmem:[%s956] sm:$0xff]
        %960 = vst [vmem:[#allocation1] ss:$2 sm:$0xff] %v954
        %s961 = scalar_lea.vmem [#allocation1], 16
        %962 = vst [vmem:[%s961] ss:$2 sm:$0xff] %v955
        %v963 = vld.sshfl [vmem:[#allocation1] sm:$0xff pattern:$0x75316420]
        %v964 = vld.sshfl [vmem:[#allocation1 + $0x8] sm:$0xff pattern:$0x75316420]
        %v965 = vld.sshfl [vmem:[#allocation1 + $0x10] sm:$0xff pattern:$0x75316420]
        %v966 = vld.sshfl [vmem:[#allocation1 + $0x18] sm:$0xff pattern:$0x75316420]
        %967 = vrot.lane.b32.xlu0 %v963, 90
        %v968 = vpop.permute.xlu0 %967
        %969 = vrot.lane.b32.xlu0 %v964, 90
        %v970 = vpop.permute.xlu0 %969
        %971 = vrot.lane.b32.xlu0 %v965, 90
        %v972 = vpop.permute.xlu0 %971
        %973 = vrot.lane.b32.xlu0 %v966, 90
        %v974 = vpop.permute.xlu0 %973
        %vm975 = vcmask 736256
        %v976 = vsel %vm975, %v968, %v970
        %v977 = vsel %vm975, %v970, %v972
        %v978 = vsel %vm975, %v972, %v974
        %v980 = vsel %vm201, %v957, 0
        %v982 = vsel %vm205, %v976, 0
        %v984 = vsel %vm205, %v977, 0
        %v986 = vsel %vm205, %v978, 0
        %988 = vmatpush.msra.mxu0 0.0
        %989 = vmatpush.msra.mxu0 0.0
        %990 = vmatpush.msra.mxu0 0.0
        %991 = vmatpush.msra.mxu0 0.0
        %992 = vmatpush.msra.mxu0 0.0
        %993 = vmatpush.msra.mxu0 0.0
        %994 = vmatpush.msra.mxu0 0.0
        %995 = vmatpush.msra.mxu0 0.0
        %996 = vmatpush.msra.mxu0 0.0
        %997 = vmatpush.msra.mxu0 0.0
        %998 = vmatpush.msra.mxu0 0.0
        %999 = vmatpush.msra.mxu0 0.0
        %1000 = vmatpush.msra.mxu0 0.0
        %1001 = vmatpush.msra.mxu0 0.0
        %1002 = vmatpush.msra.mxu0 0.0
        %1003 = vmatpush.msra.mxu0 %v982
        %1004 = vmatmul.f32.gmra.mxu0 %v980
        %v1005 = vpop.f32.mrf.mxu0
        %v1006 = vadd.f32 0.0, %v1005
        %1007 = vdwg.mxu0
        %1008 = vmatpush.msra.mxu0 0.0
        %1009 = vmatpush.msra.mxu0 0.0
        %1010 = vmatpush.msra.mxu0 0.0
        %1011 = vmatpush.msra.mxu0 0.0
        %1012 = vmatpush.msra.mxu0 0.0
        %1013 = vmatpush.msra.mxu0 0.0
        %1014 = vmatpush.msra.mxu0 0.0
        %1015 = vmatpush.msra.mxu0 0.0
        %1016 = vmatpush.msra.mxu0 0.0
        %1017 = vmatpush.msra.mxu0 0.0
        %1018 = vmatpush.msra.mxu0 0.0
        %1019 = vmatpush.msra.mxu0 0.0
        %1020 = vmatpush.msra.mxu0 0.0
        %1021 = vmatpush.msra.mxu0 0.0
        %1022 = vmatpush.msra.mxu0 0.0
        %1023 = vmatpush.msra.mxu0 %v984
        %1024 = vmatmul.f32.gmra.mxu0 %v980
        %v1025 = vpop.f32.mrf.mxu0
        %v1026 = vadd.f32 0.0, %v1025
        %1027 = vdwg.mxu0
        %1028 = vmatpush.msra.mxu0 0.0
        %1029 = vmatpush.msra.mxu0 0.0
        %1030 = vmatpush.msra.mxu0 0.0
        %1031 = vmatpush.msra.mxu0 0.0
        %1032 = vmatpush.msra.mxu0 0.0
        %1033 = vmatpush.msra.mxu0 0.0
        %1034 = vmatpush.msra.mxu0 0.0
        %1035 = vmatpush.msra.mxu0 0.0
        %1036 = vmatpush.msra.mxu0 0.0
        %1037 = vmatpush.msra.mxu0 0.0
        %1038 = vmatpush.msra.mxu0 0.0
        %1039 = vmatpush.msra.mxu0 0.0
        %1040 = vmatpush.msra.mxu0 0.0
        %1041 = vmatpush.msra.mxu0 0.0
        %1042 = vmatpush.msra.mxu0 0.0
        %1043 = vmatpush.msra.mxu0 %v986
        %1044 = vmatmul.f32.gmra.mxu0 %v980
        %v1045 = vpop.f32.mrf.mxu0
        %v1046 = vadd.f32 0.0, %v1045
        %1047 = vdwg.mxu0
        %v1048 = vadd.f32 %v951, %v1006
        %v1049 = vadd.f32 %v952, %v1026
        %v1050 = vadd.f32 %v953, %v1046
        %1051 = vst [vmem:[%s177] sm:$0xff] %v1048
        %1052 = vst [vmem:[%s177 + $0x8] sm:$0xff] %v1049
        %1053 = vst [vmem:[%s177 + $0x10] sm:$0xff] %v1050
        %s1054 = sand.u32 %s107, 1
        %s1055 = scalar_lea.sflag [#allocation3], %s1054
        %s1056 = sand.u32 %s107, 1
        %s1057 = smul.addr %s1056, 24
        %s1058 = scalar_lea.vmem [#allocation2], %s1057
        // Predicated region
        $region33: #{tpu_custom_call.1} parent=31 // pred_check
          %p1059 = pneg %p117
        $region34: #{tpu_custom_call.1} parent=31 // pred_check_branch
          %1061 = sbr.rel (%p1059) target = $region36
        $region35: #{tpu_custom_call.1} parent=31 // pred_region
          %s1062 = smul.u32 3, %s22
          %1064 = vsyncadd %s1055, 0
          %s1065 = smul.addr %s21, 3
          %s1066 = sadd.s32 %s1062, %s1065
          %s1067 = smul.addr %s1066, 8
          %s1068 = scalar_lea.hbm %s3, %s1067
          %s1070 = sshll.u32 %s1058, 4
          %s1071 = int_to_ptr.vmem [resolvable:$true] %s1070
          %s1072 = sshll.u32 %s1068, 4
          %s1073 = int_to_ptr.hbm [resolvable:$true] %s1072
          %1075 = dma.vmem_to_hbm [thread:$0]  %s1071, 384, %s1073, %s1055
        $region36: #{tpu_custom_call.1} parent=31 // pred_fallthru
          _
      $region32: #{tpu_custom_call.1} parent=5 // pred_fallthru
        _
      %p1076 = scmp.le.s32.totalorder 2, %s12
      // Predicated region
      $region37: #{tpu_custom_call.1} parent=5 // pred_check
        %p1077 = pneg %p1076
      $region38: #{tpu_custom_call.1} parent=5 // pred_check_branch
        %1079 = sbr.rel (%p1077) target = $region40
      $region39: #{tpu_custom_call.1} parent=5 // pred_region
        %s1080 = ssub.s32 %s12, 2
        // Predicated region
        $region41: #{tpu_custom_call.1} parent=39 // pred_check
          %p1081 = pneg %p123
        $region42: #{tpu_custom_call.1} parent=39 // pred_check_branch
          %1083 = sbr.rel (%p1081) target = $region44
        $region43: #{tpu_custom_call.1} parent=39 // pred_region
          %s1084 = sand.u32 %s108, 1
          %s1085 = scalar_lea.sflag [#allocation3], %s1084
          %s1086 = sand.u32 %s108, 1
          %s1087 = smul.addr %s1086, 24
          %s1088 = scalar_lea.vmem [#allocation2], %s1087
          %1090 = dma.done %s1085, 384
        $region44: #{tpu_custom_call.1} parent=39 // pred_fallthru
          _
      $region40: #{tpu_custom_call.1} parent=5 // pred_fallthru
        _
    $region6: #{tpu_custom_call.1} parent=1 // loop_footer
      %s16 = sadd.s32 1, %s12
    $region7: #{tpu_custom_call.1} parent=1 // loop_footer_branch
      %11 = sbr.rel target = $region3
    $region8: #{tpu_custom_call.1} parent=1 // loop_exit
      _
    %1091 = vsyncpa [#allocation3], 1
    %s1092 = scalar_lea.sflag [#allocation3], 1
    %1093 = vsyncpa %s1092, 1

</llo_original>
